<compile_context>
chip_gen: v6e
topology: v6e:2x2x1
jax: 0.10.0
libtpu: 0.0.40
codegen_flags: <defaults>
</compile_context>

<pallas_src>
import jax
import jax.numpy as jnp
from jax.experimental import pallas as pl
from jax.experimental.pallas import tpu as pltpu

_NEG_SENTINEL = -1e30  # padded points can never win top_k


# ---------------------------------------------------------------------------
# Small helpers
# ---------------------------------------------------------------------------
def _round_up(x, m):
    return ((x + m - 1) // m) * m


def _pick_tile(n_pad):
    for t in (512, 256, 128):
        if n_pad % t == 0:
            return t
    return 128  # unreachable: n_pad is always a multiple of 128


def _vmem_budget():
    """Per-core VMEM we allow ourselves, leaving headroom for compiler scratch."""
    try:
        cap = int(pltpu.get_tpu_info().vmem_capacity_bytes)
    except Exception:
        cap = 64 << 20  # conservative (v7x-sized) fallback
    return max(32 << 20, cap - (16 << 20))


def _vmem_limit(*block_nbytes):
    need = 2 * int(sum(block_nbytes)) + (8 << 20)  # double-buffered blocks + slack
    return int(min(_vmem_budget(), max(32 << 20, need)))


# ---------------------------------------------------------------------------
# Kernel 1: norm-augmented pairwise distance — one MXU op + store per tile.
#   pd[n, m] = 2 <x_n, x_m> - |x_n|^2 - |x_m|^2   (larger = closer)
# ---------------------------------------------------------------------------
def _pdist_kernel(a_ref, b_ref, o_ref):
    # a_ref: (C_aug, TM)  rows = [2x, -|x|^2, 1, 0...]
    # b_ref: (C_aug, TN)  rows = [ x,  1, -|x|^2, 0...]
    pd = jax.lax.dot_general(
        a_ref[...], b_ref[...],
        dimension_numbers=(((0,), (0,)), ((), ())),
        preferred_element_type=jnp.float32)
    o_ref[...] = pd.astype(o_ref.dtype)


def pairwise_distance(a_aug, b_aug, *, tile, out_dtype):
    B, c_aug, n_pad = a_aug.shape
    itm = a_aug.dtype.itemsize
    vmem = _vmem_limit(c_aug * tile * itm, c_aug * tile * itm,
                       tile * tile * jnp.dtype(out_dtype).itemsize)
    return pl.pallas_call(
        _pdist_kernel,
        out_shape=jax.ShapeDtypeStruct((B, n_pad, n_pad), out_dtype),
        grid=(B, n_pad // tile, n_pad // tile),
        in_specs=[
            pl.BlockSpec((None, c_aug, tile), lambda b, i, j: (b, 0, i)),
            pl.BlockSpec((None, c_aug, tile), lambda b, i, j: (b, 0, j)),
        ],
        out_specs=pl.BlockSpec((None, tile, tile), lambda b, i, j: (b, i, j)),
        compiler_params=pltpu.CompilerParams(
            dimension_semantics=("parallel", "parallel", "parallel"),
            vmem_limit_bytes=vmem),
    )(a_aug, b_aug)


def _augment_features(feats, n_pad, c_aug):
    """Build the two norm-augmented, channels-major operands (f32)."""
    B, C, N = feats.shape
    sq = jnp.sum(feats * feats, axis=1, keepdims=True)          # (B, 1, N)
    ones = jnp.ones_like(sq)
    extra = jnp.zeros((B, c_aug - C - 2, N), feats.dtype)
    a = jnp.concatenate([2.0 * feats, -sq, ones, extra], axis=1)   # (B, C_aug, N)
    b = jnp.concatenate([feats, ones, -sq, extra], axis=1)         # (B, C_aug, N)
    if n_pad > N:
        p = n_pad - N
        a = jnp.pad(a, ((0, 0), (0, 0), (0, p)))
        b_pad = jnp.zeros((B, c_aug, p), feats.dtype)
        b_pad = b_pad.at[:, C + 1, :].set(_NEG_SENTINEL)  # pd(real, padded) = -1e30
        b = jnp.concatenate([b, b_pad], axis=2)
    return a, b


# ---------------------------------------------------------------------------
# Kernel 2: shared MLP (two 1x1 convs + ReLU) fused with the max over the k
# neighbors.  k is a grid ("arbitrary") axis; the running max lives in the
# resident output block; the center contribution is computed once per n-tile.
# ---------------------------------------------------------------------------
def _edge_mlp_max_kernel(neigh_ref, cen_ref, w1n_ref, w1c_ref, b1_ref,
                         w2_ref, b2_ref, o_ref, hcen_ref):
    j = pl.program_id(2)

    @pl.when(j == 0)
    def _init():
        # Center-point contribution + first bias: shared by all k neighbors.
        hcen_ref[...] = jnp.dot(w1c_ref[...], cen_ref[...],
                                preferred_element_type=jnp.float32) + b1_ref[...]
        o_ref[...] = jnp.full(o_ref.shape, -jnp.inf, dtype=o_ref.dtype)

    h = jnp.dot(w1n_ref[...], neigh_ref[...],
                preferred_element_type=jnp.float32) + hcen_ref[...]
    h = jnp.maximum(h, 0.0)                                    # ReLU in f32
    y = jnp.dot(w2_ref[...], h.astype(w2_ref.dtype),
                preferred_element_type=jnp.float32)            # (F_out, TILE_N)
    o_ref[...] = jnp.maximum(o_ref[...], y)

    @pl.when(j == pl.num_programs(2) - 1)
    def _finalize():
        # Second bias is constant over neighbors -> add once, after the max.
        o_ref[...] = o_ref[...] + b2_ref[...]


def edge_mlp_max(neigh, cen, w1n_t, w1c_t, b1, w2_t, b2, *, tile_n):
    B, k, c_pad, n_pad = neigh.shape
    H = w1n_t.shape[0]
    F_out = w2_t.shape[0]
    itm = neigh.dtype.itemsize
    vmem = _vmem_limit(c_pad * tile_n * itm, c_pad * tile_n * itm,
                       F_out * tile_n * 4, H * tile_n * 4,
                       2 * H * c_pad * itm + F_out * H * itm + (H + F_out) * 4)
    # Note: weight/bias block indices are constant across the grid, so Pallas
    # only DMAs them once (pl.Buffered(1) would merely save a ~KiB buffer here).
    return pl.pallas_call(
        _edge_mlp_max_kernel,
        out_shape=jax.ShapeDtypeStruct((B, F_out, n_pad), jnp.float32),
        grid=(B, n_pad // tile_n, k),
        in_specs=[
            pl.BlockSpec((None, None, c_pad, tile_n), lambda b, t, j: (b, j, 0, t)),
            pl.BlockSpec((None, c_pad, tile_n), lambda b, t, j: (b, 0, t)),
            pl.BlockSpec((H, c_pad), lambda b, t, j: (0, 0)),
            pl.BlockSpec((H, c_pad), lambda b, t, j: (0, 0)),
            pl.BlockSpec((H, 1), lambda b, t, j: (0, 0)),
            pl.BlockSpec((F_out, H), lambda b, t, j: (0, 0)),
            pl.BlockSpec((F_out, 1), lambda b, t, j: (0, 0)),
        ],
        out_specs=pl.BlockSpec((None, F_out, tile_n), lambda b, t, j: (b, 0, t)),
        scratch_shapes=[pltpu.VMEM((H, tile_n), jnp.float32)],
        compiler_params=pltpu.CompilerParams(
            dimension_semantics=("parallel", "parallel", "arbitrary"),
            vmem_limit_bytes=vmem),
    )(neigh, cen, w1n_t, w1c_t, b1, w2_t, b2)


# ---------------------------------------------------------------------------
# Full EdgeConv forward
# ---------------------------------------------------------------------------
def edge_conv_forward(feats, params, k, *, compute_dtype=jnp.bfloat16,
                      pd_dtype=jnp.bfloat16, return_internals=False):
    B, C, N = feats.shape
    k = min(k, N)  # mirrors `if feats.shape[2] < self.k: self.k = feats.shape[2]`

    n_pad = _round_up(N, 128)
    c_pad = _round_up(C, 8)
    c_aug = _round_up(C + 2, 8)
    tile = _pick_tile(n_pad)

    # --- kNN: one-matmul pairwise distance + top_k ---------------------------
    a_aug, b_aug = _augment_features(feats.astype(jnp.float32), n_pad, c_aug)
    pd = pairwise_distance(a_aug.astype(compute_dtype),
                           b_aug.astype(compute_dtype),
                           tile=tile, out_dtype=pd_dtype)        # (B, n_pad, n_pad)
    # TODO(synk): approx_max_k / fused streaming top-k to avoid the N^2 HBM trip.
    idx = jax.lax.top_k(pd, k)[1]                                # (B, n_pad, k)

    # --- neighbor gather (XLA glue), bf16 so the kx stream is half size ------
    feats_cf = jnp.pad(feats, ((0, 0), (0, c_pad - C), (0, n_pad - N)))
    feats_cf = feats_cf.astype(compute_dtype)                    # (B, c_pad, n_pad)
    idx_kn = jnp.transpose(idx, (0, 2, 1))                       # (B, k, n_pad)
    # TODO(synk): in-kernel gather (scalar-prefetched idx + manual DMA) instead.
    neigh = jax.vmap(jax.vmap(lambda f, i: f[:, i], in_axes=(None, 0)),
                     in_axes=(0, 0))(feats_cf, idx_kn)           # (B, k, c_pad, n_pad)

    # --- split-W1 trick: concat(neigh - cen, cen) never exists ---------------
    #   h = W1a^T @ neigh + (W1b - W1a)^T @ cen + b1
    w1 = params["w1"]                                            # (2C, H)
    w1a, w1b = w1[:C], w1[C:]
    pad_rows = ((0, c_pad - C), (0, 0))
    w1n_t = jnp.pad(w1a, pad_rows).T.astype(compute_dtype)       # (H, c_pad)
    w1c_t = jnp.pad(w1b - w1a, pad_rows).T.astype(compute_dtype) # (H, c_pad)
    b1 = params["b1"].reshape(-1, 1).astype(jnp.float32)         # (H, 1)
    w2_t = params["w2"].T.astype(compute_dtype)                  # (F_out, H)
    b2 = params["b2"].reshape(-1, 1).astype(jnp.float32)         # (F_out, 1)

    out = edge_mlp_max(neigh, feats_cf, w1n_t, w1c_t, b1, w2_t, b2, tile_n=tile)
    out = out[:, :, :N]                                          # drop padded points
    if return_internals:
        return out, pd, idx
    return out


# ---------------------------------------------------------------------------
# Pure-JAX references (full f32 precision) for validation
# ---------------------------------------------------------------------------
def exact_pairwise_distance(feats):
    inner = -2.0 * jnp.einsum("bcn,bcm->bnm", feats, feats,
                              precision=jax.lax.Precision.HIGHEST)
    xx = jnp.sum(feats ** 2, axis=1, keepdims=True)
    return -xx - inner - jnp.transpose(xx, (0, 2, 1))


def edge_conv_reference_from_idx(feats, params, idx):
    """Mirrors the PyTorch module math given a fixed neighbor selection."""
    B, C, N = feats.shape
    k = idx.shape[-1]
    knn_feats = jax.vmap(lambda f, i: f[:, i])(feats, idx)       # (B, C, N, k)
    repeated = jnp.broadcast_to(feats[..., None], (B, C, N, k))
    graph = jnp.concatenate([knn_feats - repeated, repeated], axis=1)
    h = jnp.einsum("bcnk,ch->bhnk", graph, params["w1"],
                   precision=jax.lax.Precision.HIGHEST) \
        + params["b1"][0][None, :, None, None]
    h = jnp.maximum(h, 0.0)
    y = jnp.einsum("bhnk,ho->bonk", h, params["w2"],
                   precision=jax.lax.Precision.HIGHEST) \
        + params["b2"][0][None, :, None, None]
    return jnp.max(y, axis=-1)                                   # (B, out_fdim, N)


if __name__ == "__main__":
    root = jax.random.PRNGKey(0)

    def run_case(key, B, in_fdim, N, k, hidden_dim, out_fdim):
        kf, k1, k2, k3, k4 = jax.random.split(key, 5)
        feats = jax.random.normal(kf, (B, in_fdim, N), dtype=jnp.float32)
        params = {
            "w1": 0.1 * jax.random.normal(k1, (2 * in_fdim, hidden_dim), jnp.float32),
            "b1": 0.01 * jax.random.normal(k2, (1, hidden_dim), jnp.float32),
            "w2": 0.1 * jax.random.normal(k3, (hidden_dim, out_fdim), jnp.float32),
            "b2": 0.01 * jax.random.normal(k4, (1, out_fdim), jnp.float32),
        }
        kk = min(k, N)

        out, pd_kern, idx = edge_conv_forward(feats, params, k,
                                              return_internals=True)
        out = jax.block_until_ready(out)
        assert out.shape == (B, out_fdim, N), out.shape

        # (a) pairwise-distance kernel matches the exact formula (bf16-MXU tol).
        pd_exact = exact_pairwise_distance(feats)
        assert jnp.allclose(pd_kern[:, :N, :N].astype(jnp.float32), pd_exact,
                            atol=0.5, rtol=0.05), \
            float(jnp.max(jnp.abs(pd_kern[:, :N, :N].astype(jnp.float32) - pd_exact)))

        # (b) padded sentinel columns were never selected as neighbors.
        idx_real = idx[:, :N, :]
        assert bool(jnp.all(idx_real < N))

        # (c) fused MLP+max kernel matches a full-precision reference evaluated
        #     on the kernel's own neighbor selection (order-insensitive wrt
        #     near-tie kNN flips caused by reduced pd precision).
        ref_matched = edge_conv_reference_from_idx(feats, params, idx_real)
        assert jnp.allclose(out, ref_matched, atol=2e-2, rtol=2e-2), \
            float(jnp.max(jnp.abs(out - ref_matched)))

        # (d) when the selected neighbor sets agree with exact-precision kNN,
        #     the end-to-end result must also agree with the exact reference.
        idx_exact = jax.lax.top_k(pd_exact, kk)[1]
        if bool(jnp.all(jnp.sort(idx_real, axis=-1) == jnp.sort(idx_exact, axis=-1))):
            ref_exact = edge_conv_reference_from_idx(feats, params, idx_exact)
            assert jnp.allclose(out, ref_exact, atol=2e-2, rtol=2e-2), \
                float(jnp.max(jnp.abs(out - ref_exact)))

    key_a, key_b = jax.random.split(root)
    # args.k = 4, args.hidden_dim = 32, in_fdim = 4, out_fdim = 8  (small case)
    run_case(key_a, B=2, in_fdim=4, N=16, k=4, hidden_dim=32, out_fdim=8)
    # larger, non-128-aligned N: exercises point padding, multi-tile grids and
    # the k ("arbitrary") reduction axis with a 3x3 / 3x6 grid.
    run_case(key_b, B=2, in_fdim=5, N=300, k=6, hidden_dim=32, out_fdim=16)

    print("KERNEL_OK")
</pallas_src>

<mosaic_0001>
module attributes {stable_mosaic.version = 11 : i64} {
  func.func @_pdist_kernel(%arg0: i32, %arg1: i32, %arg2: i32, %arg3: memref<1x8x128xbf16, #tpu.memory_space<vmem>>, %arg4: memref<1x8x128xbf16, #tpu.memory_space<vmem>>, %arg5: memref<1x128x128xbf16, #tpu.memory_space<vmem>>) attributes {dimension_semantics = [#tpu.dimension_semantics<parallel>, #tpu.dimension_semantics<parallel>, #tpu.dimension_semantics<parallel>], iteration_bounds = array<i64: 2, 1, 1>, scalar_prefetch = 0 : i64, scratch_operands = 0 : i64, tpu.core_type = #tpu.core_type<tc>, window_params = [{transform_indices = @transform_0, window_bounds = array<i64: 1, 8, 128>}, {transform_indices = @transform_1, window_bounds = array<i64: 1, 8, 128>}, {transform_indices = @transform_2, window_bounds = array<i64: 1, 128, 128>}]} {
    %c0 = arith.constant 0 : index
    %c0_0 = arith.constant 0 : index
    %c0_1 = arith.constant 0 : index
    %0 = vector.load %arg3[%c0, %c0_0, %c0_1] : memref<1x8x128xbf16, #tpu.memory_space<vmem>>, vector<1x8x128xbf16>
    %1 = vector.shape_cast %0 : vector<1x8x128xbf16> to vector<8x128xbf16>
    %c0_2 = arith.constant 0 : index
    %c0_3 = arith.constant 0 : index
    %c0_4 = arith.constant 0 : index
    %2 = vector.load %arg4[%c0_2, %c0_3, %c0_4] : memref<1x8x128xbf16, #tpu.memory_space<vmem>>, vector<1x8x128xbf16>
    %3 = vector.shape_cast %2 : vector<1x8x128xbf16> to vector<8x128xbf16>
    %cst = arith.constant dense<0.000000e+00> : vector<128x128xf32>
    %4 = tpu.matmul %1, %3, %cst {dimension_numbers = #tpu.dot_dimension_numbers<[0], [0], [1], [1], [0, 1, 1, 1], [], []>} : vector<8x128xbf16>, vector<8x128xbf16>, vector<128x128xf32> -> vector<128x128xf32>
    %5 = arith.truncf %4 : vector<128x128xf32> to vector<128x128xbf16>
    %c0_5 = arith.constant 0 : index
    %c0_6 = arith.constant 0 : index
    %c0_7 = arith.constant 0 : index
    %6 = vector.load %arg5[%c0_5, %c0_6, %c0_7] : memref<1x128x128xbf16, #tpu.memory_space<vmem>>, vector<1x128x128xbf16>
    %7 = vector.shape_cast %6 : vector<1x128x128xbf16> to vector<128x128xbf16>
    %8 = vector.shape_cast %5 : vector<128x128xbf16> to vector<1x128x128xbf16>
    tpu.vector_store %arg5[%c0_5, %c0_6, %c0_7], %8 {strides = array<i32>} : memref<1x128x128xbf16, #tpu.memory_space<vmem>>, vector<1x128x128xbf16>,
    return
  }
  func.func @transform_0(%arg0: i32, %arg1: i32, %arg2: i32) -> (i32, i32, i32) {
    %c0_i32 = arith.constant 0 : i32
    %c0_i32_0 = arith.constant 0 : i32
    return %arg0, %c0_i32, %arg1 : i32, i32, i32
  }
  func.func @transform_1(%arg0: i32, %arg1: i32, %arg2: i32) -> (i32, i32, i32) {
    %c0_i32 = arith.constant 0 : i32
    %c0_i32_0 = arith.constant 0 : i32
    return %arg0, %c0_i32, %arg2 : i32, i32, i32
  }
  func.func @transform_2(%arg0: i32, %arg1: i32, %arg2: i32) -> (i32, i32, i32) {
    %c0_i32 = arith.constant 0 : i32
    return %arg0, %arg1, %arg2 : i32, i32, i32
  }
}

</mosaic_0001>

<llo_original>
// kernel: tpu_custom_call.1
$region0: #{tpu_custom_call.1}
  #allocation0 [shape = 'u32[]', space=smem, size = 0x4, offset = 0x4, fixed_abs, tag = 'smem constant byte address 0x4 - core index']
  #allocation1 [shape = 'u32[144,128]{1,0:T(1,128)}', space=vmem, size = 0x12000, scoped, tag = 'internal scratch']
  %s0 = inlined_call_operand.hbm [shape: bf16[2,8,128], index: 0, kind: input, shape index: {}]
  %s1 = inlined_call_operand.hbm [shape: bf16[2,8,128], index: 1, kind: input, shape index: {}]
  %s2 = inlined_call_operand.hbm [shape: bf16[2,128,128], index: 2, kind: output, shape index: {}]
  %s3 = sld [smem:[#allocation0]]
  $region49: #{tpu_custom_call.1} parent=0
    _
  %s5 = ssub.s32 1, %s3
  %s6 = scalar_select 0, %s5, %s3
  $region1: #{tpu_custom_call.1} parent=0
    #allocation2 [shape = 'u8[4096]{0}', space=vmem, size = 0x1000, scoped, tag = 'input window, operand 0']
    #allocation3 [shape = 's32[2]{0}', space=sflag, size = 0x8, scoped, tag = 'scoped memory for tpu_custom_call.1']
    #allocation4 [shape = 's32[2]{0}', space=sflag, size = 0x8, scoped, tag = 'scoped memory for tpu_custom_call.1']
    #allocation5 [shape = 'u8[4096]{0}', space=vmem, size = 0x1000, scoped, tag = 'input window, operand 1']
    #allocation6 [shape = 's32[2]{0}', space=sflag, size = 0x8, scoped, tag = 'scoped memory for tpu_custom_call.1']
    #allocation7 [shape = 'u8[65536]{0}', space=vmem, size = 0x10000, scoped, tag = 'output window, operand 0']
    %7 = vsyncpa [#allocation3], 0
    %s8 = scalar_lea.sflag [#allocation3], 1
    %9 = vsyncpa %s8, 0
    %10 = vsyncpa [#allocation6], 0
    %s11 = scalar_lea.sflag [#allocation6], 1
    %12 = vsyncpa %s11, 0
    %13 = vsyncpa [#allocation4], 0
    %s14 = scalar_lea.sflag [#allocation4], 1
    %15 = vsyncpa %s14, 0
    loop: start=0, step=1, limit=4
    $region2: #{tpu_custom_call.1} parent=1 // loop_pre_header
      _
    $region3: #{tpu_custom_call.1} parent=1 // loop_header
      %s17 = sphi 0, %s21
      %p18 = scmp.ge.s32.totalorder %s17, 4
      %s24 = sphi 0, %s43
      %s25 = sphi 0, %s39
      %s26 = sphi 0, %s35
      %s27 = sphi 0, %s24
      %s28 = sphi 0, %s25
      %s29 = sphi 0, %s26
      %s30 = sphi 0, %s27
      %s31 = sphi 0, %s28
      %s32 = sphi 0, %s29
      %s48 = sphi 0, %s50
      %s51 = sphi 0, %s48
      %s52 = sphi 0, %s51
      %s68 = sphi 0, %s52
      %s76 = sphi 0, %s78
      %s79 = sphi 0, %s76
      %s80 = sphi 0, %s79
      %s96 = sphi 0, %s80
      %s106 = sphi 0, %s108
      %s109 = sphi 0, %s106
      %s110 = sphi 0, %s109
      %s126 = sphi 0, %s110
    $region4: #{tpu_custom_call.1} parent=1 // loop_header_branch
      %20 = sbr.rel (%p18) target = $region8
    $region5: #{tpu_custom_call.1} parent=1 // loop_body
      %s22 = ssub.s32 %s17, 1
      %s23 = ssub.s32 %s17, 2
      %s33 = sadd.s32 1, %s26
      %p34 = scmp.ge.s32.totalorder %s33, 1
      %s35 = scalar_select %p34, 0, %s33
      %s36 = sadd.s32 1, %s25
      %s37 = scalar_select %p34, %s36, %s25
      %p38 = scmp.ge.s32.totalorder %s37, 1
      %s39 = scalar_select %p38, 0, %s37
      %s40 = sadd.s32 1, %s24
      %s41 = scalar_select %p38, %s40, %s24
      %p42 = scmp.ge.s32.totalorder %s41, 2
      %s43 = scalar_select %p42, 0, %s41
      %s44 = ssub.s32 %s24, %s43
      %s45 = ssub.s32 %s25, %s39
      %s46 = sor.u32 %s44, %s45
      %p47 = scmp.eq.s32.totalorder %s46, 0
      %s49 = sadd.s32 %s48, 1
      %s50 = scalar_select %p47, %s48, %s49
      %p53 = pneg %p47
      %p54 = scmp.eq.s32.totalorder %s17, 1
      %p55 = por %p53, %p54
      %p56 = scmp.ne.s32.totalorder %s48, %s51
      %p57 = scmp.eq.s32.totalorder %s17, 0
      %p58 = por %p56, %p57
      %p59 = scmp.ne.s32.totalorder %s48, %s51
      %p60 = scmp.eq.s32.totalorder %s22, 1
      %p61 = por %p59, %p60
      %p62 = scmp.ne.s32.totalorder %s51, %s52
      %p63 = scmp.eq.s32.totalorder %s22, 0
      %p64 = por %p62, %p63
      %p65 = scmp.ne.s32.totalorder %s51, %s52
      %p66 = scmp.eq.s32.totalorder %s23, 1
      %p67 = por %p65, %p66
      %p69 = scmp.ne.s32.totalorder %s52, %s68
      %p70 = scmp.eq.s32.totalorder %s23, 0
      %p71 = por %p69, %p70
      %s72 = ssub.s32 %s24, %s43
      %s73 = ssub.s32 %s26, %s35
      %s74 = sor.u32 %s72, %s73
      %p75 = scmp.eq.s32.totalorder %s74, 0
      %s77 = sadd.s32 %s76, 1
      %s78 = scalar_select %p75, %s76, %s77
      %p81 = pneg %p75
      %p82 = scmp.eq.s32.totalorder %s17, 1
      %p83 = por %p81, %p82
      %p84 = scmp.ne.s32.totalorder %s76, %s79
      %p85 = scmp.eq.s32.totalorder %s17, 0
      %p86 = por %p84, %p85
      %p87 = scmp.ne.s32.totalorder %s76, %s79
      %p88 = scmp.eq.s32.totalorder %s22, 1
      %p89 = por %p87, %p88
      %p90 = scmp.ne.s32.totalorder %s79, %s80
      %p91 = scmp.eq.s32.totalorder %s22, 0
      %p92 = por %p90, %p91
      %p93 = scmp.ne.s32.totalorder %s79, %s80
      %p94 = scmp.eq.s32.totalorder %s23, 1
      %p95 = por %p93, %p94
      %p97 = scmp.ne.s32.totalorder %s80, %s96
      %p98 = scmp.eq.s32.totalorder %s23, 0
      %p99 = por %p97, %p98
      %s100 = ssub.s32 %s24, %s43
      %s101 = ssub.s32 %s25, %s39
      %s102 = sor.u32 %s100, %s101
      %s103 = ssub.s32 %s26, %s35
      %s104 = sor.u32 %s102, %s103
      %p105 = scmp.eq.s32.totalorder %s104, 0
      %s107 = sadd.s32 %s106, 1
      %s108 = scalar_select %p105, %s106, %s107
      %p111 = pneg %p105
      %p112 = scmp.eq.s32.totalorder %s17, 1
      %p113 = por %p111, %p112
      %p114 = scmp.ne.s32.totalorder %s106, %s109
      %p115 = scmp.eq.s32.totalorder %s17, 0
      %p116 = por %p114, %p115
      %p117 = scmp.ne.s32.totalorder %s106, %s109
      %p118 = scmp.eq.s32.totalorder %s22, 1
      %p119 = por %p117, %p118
      %p120 = scmp.ne.s32.totalorder %s109, %s110
      %p121 = scmp.eq.s32.totalorder %s22, 0
      %p122 = por %p120, %p121
      %p123 = scmp.ne.s32.totalorder %s109, %s110
      %p124 = scmp.eq.s32.totalorder %s23, 1
      %p125 = por %p123, %p124
      %p127 = scmp.ne.s32.totalorder %s110, %s126
      %p128 = scmp.eq.s32.totalorder %s23, 0
      %p129 = por %p127, %p128
      %p130 = scmp.le.s32.totalorder 1, %s17
      %p131 = scmp.lt.s32.totalorder %s17, 3
      %p132 = pnand %p130, %p131
      %p133 = pneg %p132
      // Predicated region
      $region9: #{tpu_custom_call.1} parent=5 // pred_check
        _
      $region10: #{tpu_custom_call.1} parent=5 // pred_check_branch
        %135 = sbr.rel (%p132) target = $region12
      $region11: #{tpu_custom_call.1} parent=5 // pred_region
        %s136 = ssub.s32 %s17, 1
      $region12: #{tpu_custom_call.1} parent=5 // pred_fallthru
        _
      %p137 = scmp.lt.s32.totalorder %s17, 2
      // Predicated region
      $region13: #{tpu_custom_call.1} parent=5 // pred_check
        %p138 = pneg %p137
      $region14: #{tpu_custom_call.1} parent=5 // pred_check_branch
        %140 = sbr.rel (%p138) target = $region16
      $region15: #{tpu_custom_call.1} parent=5 // pred_region
        // Predicated region
        $region17: #{tpu_custom_call.1} parent=15 // pred_check
          %p141 = pneg %p58
        $region18: #{tpu_custom_call.1} parent=15 // pred_check_branch
          %143 = sbr.rel (%p141) target = $region20
        $region19: #{tpu_custom_call.1} parent=15 // pred_region
          %s144 = sand.u32 %s48, 1
          %s145 = scalar_lea.sflag [#allocation3], %s144
          %s146 = sand.u32 %s48, 1
          %s147 = smul.addr %s146, 4
          %s148 = scalar_lea.vmem [#allocation2], %s147
          %s150 = ssub.s32 64, 64
          %151 = vsyncadd %s145, %s150
          %s152 = sadd.s32 %s25, %s24
          %s153 = smul.addr %s152, 64
          %s154 = scalar_lea.hbm %s0, %s153
          %s156 = sshll.u32 %s148, 4
          %s157 = int_to_ptr.vmem [resolvable:$true] %s156
          %159 = dma.hbm_to_vmem [thread:$0]  %s154, 64, %s157, %s145
        $region20: #{tpu_custom_call.1} parent=15 // pred_fallthru
          _
        // Predicated region
        $region21: #{tpu_custom_call.1} parent=15 // pred_check
          %p160 = pneg %p86
        $region22: #{tpu_custom_call.1} parent=15 // pred_check_branch
          %162 = sbr.rel (%p160) target = $region24
        $region23: #{tpu_custom_call.1} parent=15 // pred_region
          %s163 = sand.u32 %s76, 1
          %s164 = scalar_lea.sflag [#allocation6], %s163
          %s165 = sand.u32 %s76, 1
          %s166 = smul.addr %s165, 4
          %s167 = scalar_lea.vmem [#allocation5], %s166
          %s169 = ssub.s32 64, 64
          %170 = vsyncadd %s164, %s169
          %s171 = sadd.s32 %s26, %s24
          %s172 = smul.addr %s171, 64
          %s173 = scalar_lea.hbm %s1, %s172
          %s175 = sshll.u32 %s167, 4
          %s176 = int_to_ptr.vmem [resolvable:$true] %s175
          %178 = dma.hbm_to_vmem [thread:$0]  %s173, 64, %s176, %s164
        $region24: #{tpu_custom_call.1} parent=15 // pred_fallthru
          _
      $region16: #{tpu_custom_call.1} parent=5 // pred_fallthru
        _
      %p179 = scmp.le.s32.totalorder 1, %s17
      %p180 = scmp.lt.s32.totalorder %s17, 3
      %p181 = pnand %p179, %p180
      %p182 = pneg %p181
      // Predicated region
      $region25: #{tpu_custom_call.1} parent=5 // pred_check
        _
      $region26: #{tpu_custom_call.1} parent=5 // pred_check_branch
        %184 = sbr.rel (%p181) target = $region28
      $region27: #{tpu_custom_call.1} parent=5 // pred_region
        %s185 = ssub.s32 %s17, 1
        %s186 = sand.u32 %s51, 1
        %s187 = scalar_lea.sflag [#allocation3], %s186
        %s188 = sand.u32 %s51, 1
        %s189 = smul.addr %s188, 4
        %s190 = scalar_lea.vmem [#allocation2], %s189
        // Predicated region
        $region29: #{tpu_custom_call.1} parent=27 // pred_check
          %p191 = pneg %p64
        $region30: #{tpu_custom_call.1} parent=27 // pred_check_branch
          %193 = sbr.rel (%p191) target = $region32
        $region31: #{tpu_custom_call.1} parent=27 // pred_region
          %194 = dma.done %s187, 64
        $region32: #{tpu_custom_call.1} parent=27 // pred_fallthru
          _
        %s195 = sand.u32 %s79, 1
        %s196 = scalar_lea.sflag [#allocation6], %s195
        %s197 = sand.u32 %s79, 1
        %s198 = smul.addr %s197, 4
        %s199 = scalar_lea.vmem [#allocation5], %s198
        // Predicated region
        $region33: #{tpu_custom_call.1} parent=27 // pred_check
          %p200 = pneg %p92
        $region34: #{tpu_custom_call.1} parent=27 // pred_check_branch
          %202 = sbr.rel (%p200) target = $region36
        $region35: #{tpu_custom_call.1} parent=27 // pred_region
          %203 = dma.done %s196, 64
        $region36: #{tpu_custom_call.1} parent=27 // pred_fallthru
          _
        %s204 = sand.u32 %s51, 1
        %s205 = scalar_lea.sflag [#allocation3], %s204
        %s206 = sand.u32 %s51, 1
        %s207 = smul.addr %s206, 4
        %s208 = scalar_lea.vmem [#allocation2], %s207
        %p209 = pneg %p64
        %p210 = pneg %p61
        %s211 = sand.u32 %s79, 1
        %s212 = scalar_lea.sflag [#allocation6], %s211
        %s213 = sand.u32 %s79, 1
        %s214 = smul.addr %s213, 4
        %s215 = scalar_lea.vmem [#allocation5], %s214
        %p216 = pneg %p92
        %p217 = pneg %p89
        %p218 = pneg %p122
        %p219 = pneg %p119
        %s220 = sand.u32 %s109, 1
        %s221 = scalar_lea.sflag [#allocation4], %s220
        %s222 = sand.u32 %s109, 1
        %s223 = smul.addr %s222, 64
        %s224 = scalar_lea.vmem [#allocation7], %s223
        %s225 = smul.u32 16, %s28
        %v227 = vld [vmem:[%s190] sm:$0xf]
        %v228 = vld [vmem:[%s199] sm:$0xf]
        %229 = vxpose.xlu0.c.b16.start [1/8] %v227, 128
        %230 = vxpose.xlu0.c.b16.cont [2/8] 0, 128
        %231 = vxpose.xlu0.c.b16.cont [3/8] 0, 128
        %232 = vxpose.xlu0.c.b16.cont [4/8] 0, 128
        %233 = vxpose.xlu0.c.b16.cont [5/8] 0, 128
        %234 = vxpose.xlu0.c.b16.cont [6/8] 0, 128
        %235 = vxpose.xlu0.c.b16.cont [7/8] 0, 128
        %236 = vxpose.xlu0.c.b16.end [8/8] 0, 128
        %v237 = vpop.trf.xlu0
        %v238 = vpop.trf.xlu0
        %v239 = vpop.trf.xlu0
        %v240 = vpop.trf.xlu0
        %v241 = vpop.trf.xlu0
        %v242 = vpop.trf.xlu0
        %v243 = vpop.trf.xlu0
        %v244 = vpop.trf.xlu0
        %vm245 = vcmask 64512
        %v247 = vsel %vm245, %v237, 0
        %v250 = vsel %vm245, %v238, 0
        %v253 = vsel %vm245, %v239, 0
        %v256 = vsel %vm245, %v240, 0
        %v259 = vsel %vm245, %v241, 0
        %v262 = vsel %vm245, %v242, 0
        %v265 = vsel %vm245, %v243, 0
        %v268 = vsel %vm245, %v244, 0
        %vm270 = vcmask 1043456
        %v272 = vsel %vm270, %v228, 0
        %274 = vmatprep.subr.bf16.mxu0 0
        %275 = vmatpush1.bf16.msra.mxu0 0
        %276 = vmatprep.subr.bf16.mxu0 0
        %277 = vmatpush1.bf16.msra.mxu0 0
        %278 = vmatprep.subr.bf16.mxu0 0
        %279 = vmatpush1.bf16.msra.mxu0 0
        %280 = vmatprep.subr.bf16.mxu0 0
        %281 = vmatpush1.bf16.msra.mxu0 0
        %282 = vmatprep.subr.bf16.mxu0 0
        %283 = vmatpush1.bf16.msra.mxu0 0
        %284 = vmatprep.subr.bf16.mxu0 0
        %285 = vmatpush1.bf16.msra.mxu0 0
        %286 = vmatprep.subr.bf16.mxu0 0
        %287 = vmatpush1.bf16.msra.mxu0 0
        %288 = vmatprep.subr.bf16.mxu0 0
        %289 = vmatpush1.bf16.msra.mxu0 %v272
        %290 = vmatprep.subr.bf16.mxu0 0
        %291 = vmatpush2.bf16.msra.mxu0 0
        %292 = vmatprep.subr.bf16.mxu0 0
        %293 = vmatpush2.bf16.msra.mxu0 0
        %294 = vmatprep.subr.bf16.mxu0 0
        %295 = vmatpush2.bf16.msra.mxu0 0
        %296 = vmatprep.subr.bf16.mxu0 0
        %297 = vmatpush2.bf16.msra.mxu0 0
        %298 = vmatprep.subr.bf16.mxu0 0
        %299 = vmatpush2.bf16.msra.mxu0 0
        %300 = vmatprep.subr.bf16.mxu0 0
        %301 = vmatpush2.bf16.msra.mxu0 0
        %302 = vmatprep.subr.bf16.mxu0 0
        %303 = vmatpush2.bf16.msra.mxu0 0
        %304 = vmatprep.subr.bf16.mxu0 0
        %305 = vmatpush2.bf16.msra.mxu0 0
        %306 = vmatprep.mubr.bf16.mxu0 0
        %307 = vmatmul.mubr.bf16.gmra.mxu0 %v247
        %v308 = vpop.f32.mrf.mxu0
        %v309 = vadd.f32 0.0, %v308
        %v310 = vpop.f32.mrf.mxu0
        %v311 = vpop.f32.mrf.mxu0
        %v312 = vadd.f32 0.0, %v311
        %v313 = vpop.f32.mrf.mxu0
        %314 = vmatprep.mubr.bf16.mxu0 0
        %315 = vmatmul.mubr.bf16.gmra.mxu0 %v250
        %v316 = vpop.f32.mrf.mxu0
        %v317 = vadd.f32 0.0, %v316
        %v318 = vpop.f32.mrf.mxu0
        %v319 = vpop.f32.mrf.mxu0
        %v320 = vadd.f32 0.0, %v319
        %v321 = vpop.f32.mrf.mxu0
        %322 = vmatprep.mubr.bf16.mxu0 0
        %323 = vmatmul.mubr.bf16.gmra.mxu0 %v253
        %v324 = vpop.f32.mrf.mxu0
        %v325 = vadd.f32 0.0, %v324
        %v326 = vpop.f32.mrf.mxu0
        %v327 = vpop.f32.mrf.mxu0
        %v328 = vadd.f32 0.0, %v327
        %v329 = vpop.f32.mrf.mxu0
        %330 = vmatprep.mubr.bf16.mxu0 0
        %331 = vmatmul.mubr.bf16.gmra.mxu0 %v256
        %v332 = vpop.f32.mrf.mxu0
        %v333 = vadd.f32 0.0, %v332
        %v334 = vpop.f32.mrf.mxu0
        %v335 = vpop.f32.mrf.mxu0
        %v336 = vadd.f32 0.0, %v335
        %v337 = vpop.f32.mrf.mxu0
        %338 = vmatprep.mubr.bf16.mxu0 0
        %339 = vmatmul.mubr.bf16.gmra.mxu0 %v259
        %v340 = vpop.f32.mrf.mxu0
        %v341 = vadd.f32 0.0, %v340
        %v342 = vpop.f32.mrf.mxu0
        %v343 = vpop.f32.mrf.mxu0
        %v344 = vadd.f32 0.0, %v343
        %v345 = vpop.f32.mrf.mxu0
        %346 = vmatprep.mubr.bf16.mxu0 0
        %347 = vmatmul.mubr.bf16.gmra.mxu0 %v262
        %v348 = vpop.f32.mrf.mxu0
        %v349 = vadd.f32 0.0, %v348
        %v350 = vpop.f32.mrf.mxu0
        %v351 = vpop.f32.mrf.mxu0
        %v352 = vadd.f32 0.0, %v351
        %v353 = vpop.f32.mrf.mxu0
        %354 = vmatprep.mubr.bf16.mxu0 0
        %355 = vmatmul.mubr.bf16.gmra.mxu0 %v265
        %v356 = vpop.f32.mrf.mxu0
        %v357 = vadd.f32 0.0, %v356
        %v358 = vpop.f32.mrf.mxu0
        %v359 = vpop.f32.mrf.mxu0
        %v360 = vadd.f32 0.0, %v359
        %v361 = vpop.f32.mrf.mxu0
        %362 = vmatprep.mubr.bf16.mxu0 0
        %363 = vmatmul.mubr.bf16.gmra.mxu0 %v268
        %v364 = vpop.f32.mrf.mxu0
        %v365 = vadd.f32 0.0, %v364
        %v366 = vpop.f32.mrf.mxu0
        %v367 = vpop.f32.mrf.mxu0
        %v368 = vadd.f32 0.0, %v367
        %v369 = vpop.f32.mrf.mxu0
        %370 = vdwg.mxu0
        %v371 = vpack.c.bf16 %v312, %v309
        %v372 = vpack.c.bf16 %v320, %v317
        %v373 = vpack.c.bf16 %v328, %v325
        %v374 = vpack.c.bf16 %v336, %v333
        %v375 = vpack.c.bf16 %v344, %v341
        %v376 = vpack.c.bf16 %v352, %v349
        %v377 = vpack.c.bf16 %v360, %v357
        %v378 = vpack.c.bf16 %v368, %v365
        %v387 = vunpack.c.l.b16 %v371
        %v388 = vunpack.c.h.b16 %v371
        %v389 = vunpack.c.l.b16 %v372
        %v390 = vunpack.c.h.b16 %v372
        %v391 = vunpack.c.l.b16 %v373
        %v392 = vunpack.c.h.b16 %v373
        %v393 = vunpack.c.l.b16 %v374
        %v394 = vunpack.c.h.b16 %v374
        %v395 = vunpack.c.l.b16 %v375
        %v396 = vunpack.c.h.b16 %v375
        %v397 = vunpack.c.l.b16 %v376
        %v398 = vunpack.c.h.b16 %v376
        %v399 = vunpack.c.l.b16 %v377
        %v400 = vunpack.c.h.b16 %v377
        %v401 = vunpack.c.l.b16 %v378
        %v402 = vunpack.c.h.b16 %v378
        %v403 = vpack.c.b16 %v387, %v387
        %v404 = vpack.c.b16 %v388, %v388
        %v405 = vpack.c.b16 %v389, %v389
        %v406 = vpack.c.b16 %v390, %v390
        %v407 = vpack.c.b16 %v391, %v391
        %v408 = vpack.c.b16 %v392, %v392
        %v409 = vpack.c.b16 %v393, %v393
        %v410 = vpack.c.b16 %v394, %v394
        %v411 = vpack.c.b16 %v395, %v395
        %v412 = vpack.c.b16 %v396, %v396
        %v413 = vpack.c.b16 %v397, %v397
        %v414 = vpack.c.b16 %v398, %v398
        %v415 = vpack.c.b16 %v399, %v399
        %v416 = vpack.c.b16 %v400, %v400
        %v417 = vpack.c.b16 %v401, %v401
        %v418 = vpack.c.b16 %v402, %v402
        %435 = vst [vmem:[%s224] sm:$0xf] %v403
        %436 = vst [vmem:[%s224 + $0x4] sm:$0xf] %v404
        %437 = vst [vmem:[%s224 + $0x8] sm:$0xf] %v405
        %438 = vst [vmem:[%s224 + $0xc] sm:$0xf] %v406
        %439 = vst [vmem:[%s224 + $0x10] sm:$0xf] %v407
        %440 = vst [vmem:[%s224 + $0x14] sm:$0xf] %v408
        %441 = vst [vmem:[%s224 + $0x18] sm:$0xf] %v409
        %442 = vst [vmem:[%s224 + $0x1c] sm:$0xf] %v410
        %443 = vst [vmem:[%s224 + $0x20] sm:$0xf] %v411
        %444 = vst [vmem:[%s224 + $0x24] sm:$0xf] %v412
        %445 = vst [vmem:[%s224 + $0x28] sm:$0xf] %v413
        %446 = vst [vmem:[%s224 + $0x2c] sm:$0xf] %v414
        %447 = vst [vmem:[%s224 + $0x30] sm:$0xf] %v415
        %448 = vst [vmem:[%s224 + $0x34] sm:$0xf] %v416
        %449 = vst [vmem:[%s224 + $0x38] sm:$0xf] %v417
        %450 = vst [vmem:[%s224 + $0x3c] sm:$0xf] %v418
        %s451 = sand.u32 %s109, 1
        %s452 = scalar_lea.sflag [#allocation4], %s451
        %s453 = sand.u32 %s109, 1
        %s454 = smul.addr %s453, 64
        %s455 = scalar_lea.vmem [#allocation7], %s454
        // Predicated region
        $region37: #{tpu_custom_call.1} parent=27 // pred_check
          %p456 = pneg %p119
        $region38: #{tpu_custom_call.1} parent=27 // pred_check_branch
          %458 = sbr.rel (%p456) target = $region40
        $region39: #{tpu_custom_call.1} parent=27 // pred_region
          %s459 = smul.u32 16, %s28
          %s461 = ssub.s32 1024, 1024
          %462 = vsyncadd %s452, %s461
          %s463 = sadd.s32 %s29, %s459
          %s464 = smul.addr %s27, 16
          %s465 = sadd.s32 %s463, %s464
          %s466 = smul.addr %s465, 64
          %s467 = scalar_lea.hbm %s2, %s466
          %s468 = sshll.u32 %s455, 4
          %s469 = int_to_ptr.vmem [resolvable:$true] %s468
          %474 = dma.vmem_to_hbm [thread:$0]  %s469, 1024, %s467, %s452, 64, 64, 4
        $region40: #{tpu_custom_call.1} parent=27 // pred_fallthru
          _
      $region28: #{tpu_custom_call.1} parent=5 // pred_fallthru
        _
      %p475 = scmp.le.s32.totalorder 2, %s17
      // Predicated region
      $region41: #{tpu_custom_call.1} parent=5 // pred_check
        %p476 = pneg %p475
      $region42: #{tpu_custom_call.1} parent=5 // pred_check_branch
        %478 = sbr.rel (%p476) target = $region44
      $region43: #{tpu_custom_call.1} parent=5 // pred_region
        %s479 = ssub.s32 %s17, 2
        // Predicated region
        $region45: #{tpu_custom_call.1} parent=43 // pred_check
          %p480 = pneg %p125
        $region46: #{tpu_custom_call.1} parent=43 // pred_check_branch
          %482 = sbr.rel (%p480) target = $region48
        $region47: #{tpu_custom_call.1} parent=43 // pred_region
          %s483 = sand.u32 %s110, 1
          %s484 = scalar_lea.sflag [#allocation4], %s483
          %s485 = sand.u32 %s110, 1
          %s486 = smul.addr %s485, 64
          %s487 = scalar_lea.vmem [#allocation7], %s486
          %488 = dma.done %s484, 1024
        $region48: #{tpu_custom_call.1} parent=43 // pred_fallthru
          _
      $region44: #{tpu_custom_call.1} parent=5 // pred_fallthru
        _
    $region6: #{tpu_custom_call.1} parent=1 // loop_footer
      %s21 = sadd.s32 1, %s17
    $region7: #{tpu_custom_call.1} parent=1 // loop_footer_branch
      %16 = sbr.rel target = $region3
    $region8: #{tpu_custom_call.1} parent=1 // loop_exit
      _
    %489 = vsyncpa [#allocation3], 1
    %s490 = scalar_lea.sflag [#allocation3], 1
    %491 = vsyncpa %s490, 1
    %492 = vsyncpa [#allocation6], 1
    %s493 = scalar_lea.sflag [#allocation6], 1
    %494 = vsyncpa %s493, 1
    %495 = vsyncpa [#allocation4], 1
    %s496 = scalar_lea.sflag [#allocation4], 1
    %497 = vsyncpa %s496, 1

</llo_original>
